<compile_context>
chip_gen: v7x
topology: tpu7x:2x2x1
jax: 0.10.0
libtpu: 0.0.40
codegen_flags: <defaults>
</compile_context>

<pallas_src>
import jax
import jax.numpy as jnp
from jax.experimental import pallas as pl
from jax.experimental.pallas import tpu as pltpu

IN_DIM = 576        # fc input  (nn.Linear(576, 192))
HID_DIM = 192       # fc output / fc1 input
N_CLASSES = 26      # fc1 output (nn.Linear(192, 26))

# Batch tile.  At TB=1024 the pipeline needs ~6.8 MiB (bf16 inputs) /
# ~13.6 MiB (f32 inputs) of double-buffered input VMEM + ~0.3 MiB weights/out,
# amortizing the ~0.35 us/grid-step overhead (measured 512->85%, 1024->86% of
# the HBM roofline for mem-bound kernels).
DEFAULT_TB = 1024
# Explicit scoped-VMEM limit: covers the f32 path with headroom and stays under
# v5e's 16 MiB default would not, so we raise it; well inside every
# generation's physical VMEM (64 MiB/TC on v7x, 128 MiB elsewhere).
_VMEM_LIMIT_BYTES = 24 * 1024 * 1024
# Below this batch size a single tile is fine; at/above it we force >= 2 grid
# steps so both v7x TensorCores participate.
_MIN_SPLIT_BATCH = 64


def collapse_fc_weights(w_fc, b_fc, w_fc1, b_fc1, *, param_dtype=jnp.bfloat16):
    """Collapse fc∘fc1 into one Linear(576 -> 26).  Call ONCE at load time.

    w_fc  : [576, 192], b_fc  : [192]   (PyTorch Linear stores [out, in];
    w_fc1 : [192, 26],  b_fc1 : [26]     transpose checkpoint weights on load)
    Returns (W [576, 26] in param_dtype, b [1, 26] f32).
    """
    w_fc = w_fc.astype(jnp.float32)
    w_fc1 = w_fc1.astype(jnp.float32)
    w = jnp.dot(w_fc, w_fc1, preferred_element_type=jnp.float32)          # [576, 26]
    b = (jnp.dot(b_fc.reshape(1, HID_DIM).astype(jnp.float32), w_fc1,
                 preferred_element_type=jnp.float32)
         + b_fc1.reshape(1, N_CLASSES).astype(jnp.float32))               # [1, 26]
    return w.astype(param_dtype), b


def _sum_fc_kernel(x1_ref, x2_ref, x3_ref, w_ref, b_ref, o_ref):
    # 3-way element-wise sum of branch outputs (VPU; bf16 adds natively on
    # v6e/v7x, auto-upcast on v5e).
    s = x1_ref[...] + x2_ref[...] + x3_ref[...]                           # [TB, 576]
    # Collapsed fc∘fc1: single Linear(576 -> 26) on the MXU, f32 accumulate.
    o = jnp.dot(s, w_ref[...], preferred_element_type=jnp.float32)        # [TB, 26]
    o_ref[...] = (o + b_ref[...]).astype(o_ref.dtype)                     # +bias (f32)


def _choose_batch_tile(B, tb):
    """Batch tile: multiple of 8 (or the full batch); for B >= 64 guarantee
    >= 2 grid steps so dimension_semantics=("parallel",) spreads work over
    both v7x TensorCores."""
    tb = max(8, (int(tb) // 8) * 8)
    if B < _MIN_SPLIT_BATCH:
        return B if B <= tb else tb          # full-extent block is always legal
    half = ((pl.cdiv(B, 2) + 7) // 8) * 8    # >= 2 steps, sublane-aligned
    return min(tb, half)


def sum_model1_forward(out1, out2, out3, w, b, *, tb=DEFAULT_TB,
                       compute_dtype=jnp.bfloat16):
    """Pallas TPU implementation of sumModel1's fusion + fc + fc1.

    out1, out2, out3 : [B, 576]  -- outputs of the three sub-models
    w : [576, 26], b : [26] or [1, 26]  -- from collapse_fc_weights()
    compute_dtype    : dtype the inputs/weight are fed to the kernel in
                       (bf16 default: ~2x less HBM read traffic; use
                       jnp.float32 for the exact-f32 path).
    Returns [B, 26] f32.
    """
    B = out1.shape[0]

    # Casts are no-ops if the producers already emit compute_dtype (preferred).
    x1 = out1.astype(compute_dtype)
    x2 = out2.astype(compute_dtype)
    x3 = out3.astype(compute_dtype)
    w = w.astype(compute_dtype)
    b = b.reshape(1, N_CLASSES).astype(jnp.float32)

    TB = _choose_batch_tile(B, tb)
    grid = (pl.cdiv(B, TB),)

    batch_spec = pl.BlockSpec((TB, IN_DIM), lambda i: (i, 0))
    # Weight / bias are grid-invariant (constant index_map -> stay resident).
    w_spec = pl.BlockSpec((IN_DIM, N_CLASSES), lambda i: (0, 0))
    b_spec = pl.BlockSpec((1, N_CLASSES), lambda i: (0, 0))

    return pl.pallas_call(
        _sum_fc_kernel,
        out_shape=jax.ShapeDtypeStruct((B, N_CLASSES), jnp.float32),
        grid=grid,
        in_specs=[
            batch_spec,   # out1
            batch_spec,   # out2
            batch_spec,   # out3
            w_spec,       # collapsed weight [576, 26]
            b_spec,       # collapsed bias   [1, 26]
        ],
        out_specs=pl.BlockSpec((TB, N_CLASSES), lambda i: (i, 0)),
        compiler_params=pltpu.CompilerParams(
            # batch tiles are independent -> shard across the 2 TCs on v7x
            dimension_semantics=("parallel",),
            vmem_limit_bytes=_VMEM_LIMIT_BYTES,
        ),
    )(x1, x2, x3, w, b)


def _reference(out1, out2, out3, w_fc, b_fc, w_fc1, b_fc1):
    # Original two-stage semantics of the PyTorch module (f32).
    s = out1 + out2 + out3
    h = s @ w_fc + b_fc
    return h @ w_fc1 + b_fc1


if __name__ == "__main__":
    key = jax.random.PRNGKey(0)
    k1, k2, k3, kw1, kb1, kw2, kb2, k4, k5, k6 = jax.random.split(key, 10)

    B = 16  # small batch for the primary test

    # Branch outputs (stand-ins for model1/model2/model3 outputs), [B, 576].
    out1 = jax.random.normal(k1, (B, IN_DIM), dtype=jnp.float32)
    out2 = jax.random.normal(k2, (B, IN_DIM), dtype=jnp.float32)
    out3 = jax.random.normal(k3, (B, IN_DIM), dtype=jnp.float32)

    # Parameters kept [in_features, out_features] (transpose of PyTorch storage).
    w_fc = jax.random.normal(kw1, (IN_DIM, HID_DIM), dtype=jnp.float32) * 0.02
    b_fc = jax.random.normal(kb1, (HID_DIM,), dtype=jnp.float32) * 0.02
    w_fc1 = jax.random.normal(kw2, (HID_DIM, N_CLASSES), dtype=jnp.float32) * 0.02
    b_fc1 = jax.random.normal(kb2, (N_CLASSES,), dtype=jnp.float32) * 0.02

    ref = _reference(out1, out2, out3, w_fc, b_fc, w_fc1, b_fc1)

    # ---- default bf16 path (collapse done once, outside the forward call) ----
    w_bf16, b_col = collapse_fc_weights(w_fc, b_fc, w_fc1, b_fc1,
                                        param_dtype=jnp.bfloat16)

    # tb=8 forces a 2-step grid to exercise pipelining / multi-step writeback.
    out_bf16 = jax.block_until_ready(
        sum_model1_forward(out1, out2, out3, w_bf16, b_col, tb=8))
    assert out_bf16.shape == (B, N_CLASSES), out_bf16.shape
    assert out_bf16.dtype == jnp.float32
    assert jnp.allclose(out_bf16, ref, atol=3e-2, rtol=3e-2), "bf16 path mismatch"

    # Default tile size (single-tile path for this small batch).
    out_bf16_full = jax.block_until_ready(
        sum_model1_forward(out1, out2, out3, w_bf16, b_col))
    assert jnp.allclose(out_bf16_full, ref, atol=3e-2, rtol=3e-2), \
        "bf16 path mismatch (full tile)"

    # ---- exact-f32 path (two-stage-equivalent numerics up to f32 rounding) ----
    w_f32, b_f32 = collapse_fc_weights(w_fc, b_fc, w_fc1, b_fc1,
                                       param_dtype=jnp.float32)
    out_f32 = jax.block_until_ready(
        sum_model1_forward(out1, out2, out3, w_f32, b_f32,
                           compute_dtype=jnp.float32))
    assert jnp.allclose(out_f32, ref, atol=1e-4, rtol=1e-4), "f32 path mismatch"

    # ---- larger batch: exercises the >=2-step auto-split and a ragged tile ----
    B2 = 100
    o1 = jax.random.normal(k4, (B2, IN_DIM), dtype=jnp.float32)
    o2 = jax.random.normal(k5, (B2, IN_DIM), dtype=jnp.float32)
    o3 = jax.random.normal(k6, (B2, IN_DIM), dtype=jnp.float32)
    ref2 = _reference(o1, o2, o3, w_fc, b_fc, w_fc1, b_fc1)
    out2_bf16 = jax.block_until_ready(
        sum_model1_forward(o1, o2, o3, w_bf16, b_col))
    assert out2_bf16.shape == (B2, N_CLASSES)
    assert jnp.allclose(out2_bf16, ref2, atol=3e-2, rtol=3e-2), \
        "bf16 path mismatch (split/ragged grid)"

    print("KERNEL_OK")
</pallas_src>

<mosaic_0001>
module attributes {stable_mosaic.version = 11 : i64} {
  func.func @_sum_fc_kernel(%arg0: i32, %arg1: memref<8x576xbf16, #tpu.memory_space<vmem>>, %arg2: memref<8x576xbf16, #tpu.memory_space<vmem>>, %arg3: memref<8x576xbf16, #tpu.memory_space<vmem>>, %arg4: memref<576x26xbf16, #tpu.memory_space<vmem>>, %arg5: memref<1x26xf32, #tpu.memory_space<vmem>>, %arg6: memref<8x26xf32, #tpu.memory_space<vmem>>) attributes {dimension_semantics = [#tpu.dimension_semantics<parallel>], iteration_bounds = array<i64: 2>, scalar_prefetch = 0 : i64, scratch_operands = 0 : i64, tpu.core_type = #tpu.core_type<tc>, window_params = [{transform_indices = @transform_0, window_bounds = array<i64: 8, 576>}, {transform_indices = @transform_1, window_bounds = array<i64: 8, 576>}, {transform_indices = @transform_2, window_bounds = array<i64: 8, 576>}, {pipeline_mode = #tpu.pipeline_mode<synchronous>, transform_indices = @transform_3, window_bounds = array<i64: 576, 26>}, {pipeline_mode = #tpu.pipeline_mode<synchronous>, transform_indices = @transform_4, window_bounds = array<i64: 1, 26>}, {transform_indices = @transform_5, window_bounds = array<i64: 8, 26>}]} {
    %c0 = arith.constant 0 : index
    %c0_0 = arith.constant 0 : index
    %0 = vector.load %arg1[%c0, %c0_0] : memref<8x576xbf16, #tpu.memory_space<vmem>>, vector<8x576xbf16>
    %c0_1 = arith.constant 0 : index
    %c0_2 = arith.constant 0 : index
    %1 = vector.load %arg2[%c0_1, %c0_2] : memref<8x576xbf16, #tpu.memory_space<vmem>>, vector<8x576xbf16>
    %2 = arith.addf %0, %1 : vector<8x576xbf16>
    %c0_3 = arith.constant 0 : index
    %c0_4 = arith.constant 0 : index
    %3 = vector.load %arg3[%c0_3, %c0_4] : memref<8x576xbf16, #tpu.memory_space<vmem>>, vector<8x576xbf16>
    %4 = arith.addf %2, %3 : vector<8x576xbf16>
    %c0_5 = arith.constant 0 : index
    %c0_6 = arith.constant 0 : index
    %5 = vector.load %arg4[%c0_5, %c0_6] : memref<576x26xbf16, #tpu.memory_space<vmem>>, vector<576x26xbf16>
    %cst = arith.constant dense<0.000000e+00> : vector<8x26xf32>
    %6 = tpu.matmul %4, %5, %cst {dimension_numbers = #tpu.dot_dimension_numbers<[1], [0], [0], [1], [0, 0, 1, 1], [], []>} : vector<8x576xbf16>, vector<576x26xbf16>, vector<8x26xf32> -> vector<8x26xf32>
    %c0_7 = arith.constant 0 : index
    %c0_8 = arith.constant 0 : index
    %7 = vector.load %arg5[%c0_7, %c0_8] : memref<1x26xf32, #tpu.memory_space<vmem>>, vector<1x26xf32>
    %8 = vector.broadcast %7 : vector<1x26xf32> to vector<8x26xf32>
    %9 = arith.addf %6, %8 : vector<8x26xf32>
    %c0_9 = arith.constant 0 : index
    %c0_10 = arith.constant 0 : index
    %10 = vector.load %arg6[%c0_9, %c0_10] : memref<8x26xf32, #tpu.memory_space<vmem>>, vector<8x26xf32>
    tpu.vector_store %arg6[%c0_9, %c0_10], %9 {strides = array<i32>} : memref<8x26xf32, #tpu.memory_space<vmem>>, vector<8x26xf32>,
    return
  }
  func.func @transform_0(%arg0: i32) -> (i32, i32) {
    %c0_i32 = arith.constant 0 : i32
    %c0_i32_0 = arith.constant 0 : i32
    return %arg0, %c0_i32 : i32, i32
  }
  func.func @transform_1(%arg0: i32) -> (i32, i32) {
    %c0_i32 = arith.constant 0 : i32
    %c0_i32_0 = arith.constant 0 : i32
    return %arg0, %c0_i32 : i32, i32
  }
  func.func @transform_2(%arg0: i32) -> (i32, i32) {
    %c0_i32 = arith.constant 0 : i32
    %c0_i32_0 = arith.constant 0 : i32
    return %arg0, %c0_i32 : i32, i32
  }
  func.func @transform_3(%arg0: i32) -> (i32, i32) {
    %c0_i32 = arith.constant 0 : i32
    %c0_i32_0 = arith.constant 0 : i32
    %c0_i32_1 = arith.constant 0 : i32
    return %c0_i32, %c0_i32_0 : i32, i32
  }
  func.func @transform_4(%arg0: i32) -> (i32, i32) {
    %c0_i32 = arith.constant 0 : i32
    %c0_i32_0 = arith.constant 0 : i32
    %c0_i32_1 = arith.constant 0 : i32
    return %c0_i32, %c0_i32_0 : i32, i32
  }
  func.func @transform_5(%arg0: i32) -> (i32, i32) {
    %c0_i32 = arith.constant 0 : i32
    %c0_i32_0 = arith.constant 0 : i32
    return %arg0, %c0_i32 : i32, i32
  }
}

</mosaic_0001>

<llo_original>
// kernel: tpu_custom_call.1
$region0: #{tpu_custom_call.1}
  #allocation0 [shape = 'u32[]', space=smem, size = 0x4, offset = 0x4, fixed_abs, tag = 'smem constant byte address 0x4 - core index']
  #allocation1 [shape = 'u32[144,128]{1,0:T(1,128)}', space=vmem, size = 0x12000, scoped, tag = 'internal scratch']
  %s0 = inlined_call_operand.vmem [shape: bf16[16,576], index: 0, kind: input, shape index: {}]
  %s1 = inlined_call_operand.vmem [shape: bf16[16,576], index: 1, kind: input, shape index: {}]
  %s2 = inlined_call_operand.vmem [shape: bf16[16,576], index: 2, kind: input, shape index: {}]
  %s3 = inlined_call_operand.vmem [shape: bf16[576,26], index: 3, kind: input, shape index: {}]
  %s4 = inlined_call_operand.vmem [shape: f32[1,26], index: 4, kind: input, shape index: {}]
  %s5 = inlined_call_operand.hbm [shape: f32[16,26], index: 5, kind: output, shape index: {}]
  %s6 = sld [smem:[#allocation0]]
  $region53: #{tpu_custom_call.1} parent=0
    _
  %s8 = ssub.s32 1, %s6
  %s9 = scalar_select 0, %s8, %s6
  $region1: #{tpu_custom_call.1} parent=0
    #allocation2 [shape = 'u8[8192]{0}', space=vmem, size = 0x2000, scoped, tag = 'output window, operand 0']
    #allocation3 [shape = 's32[2]{0}', space=sflag, size = 0x8, scoped, tag = 'scoped memory for tpu_custom_call.1']
    %10 = vsyncpa [#allocation3], 0
    %s11 = scalar_lea.sflag [#allocation3], 1
    %12 = vsyncpa %s11, 0
    loop: start=0, step=1, limit=4
    $region2: #{tpu_custom_call.1} parent=1 // loop_pre_header
      _
    $region3: #{tpu_custom_call.1} parent=1 // loop_header
      %s14 = sphi 0, %s18
      %p15 = scmp.ge.s32.totalorder %s14, 4
      %s24 = sphi 0, %s26
      %s27 = sphi 0, %s24
      %s28 = sphi 0, %s27
      %s44 = sphi 0, %s28
      %s50 = sphi 0, %s52
      %s53 = sphi 0, %s50
      %s54 = sphi 0, %s53
      %s70 = sphi 0, %s54
      %s76 = sphi 0, %s78
      %s79 = sphi 0, %s76
      %s80 = sphi 0, %s79
      %s96 = sphi 0, %s80
      %s100 = sphi 0, %s100
      %s102 = sphi 0, %s100
      %s103 = sphi 0, %s102
      %s117 = sphi 0, %s103
      %s121 = sphi 0, %s121
      %s123 = sphi 0, %s121
      %s124 = sphi 0, %s123
      %s138 = sphi 0, %s124
      %s144 = sphi 0, %s146
      %s147 = sphi 0, %s144
      %s148 = sphi 0, %s147
      %s164 = sphi 0, %s148
    $region4: #{tpu_custom_call.1} parent=1 // loop_header_branch
      %17 = sbr.rel (%p15) target = $region8
    $region5: #{tpu_custom_call.1} parent=1 // loop_body
      %s19 = ssub.s32 %s14, 1
      %s20 = ssub.s32 %s14, 2
      %s21 = sadd.s32 %s14, 1
      %s22 = ssub.s32 %s14, %s21
      %p23 = scmp.eq.s32.totalorder %s22, 0
      %s25 = sadd.s32 %s24, 1
      %s26 = scalar_select %p23, %s24, %s25
      %p29 = pneg %p23
      %p30 = scmp.eq.s32.totalorder %s14, 1
      %p31 = por %p29, %p30
      %p32 = scmp.ne.s32.totalorder %s24, %s27
      %p33 = scmp.eq.s32.totalorder %s14, 0
      %p34 = por %p32, %p33
      %p35 = scmp.ne.s32.totalorder %s24, %s27
      %p36 = scmp.eq.s32.totalorder %s19, 1
      %p37 = por %p35, %p36
      %p38 = scmp.ne.s32.totalorder %s27, %s28
      %p39 = scmp.eq.s32.totalorder %s19, 0
      %p40 = por %p38, %p39
      %p41 = scmp.ne.s32.totalorder %s27, %s28
      %p42 = scmp.eq.s32.totalorder %s20, 1
      %p43 = por %p41, %p42
      %p45 = scmp.ne.s32.totalorder %s28, %s44
      %p46 = scmp.eq.s32.totalorder %s20, 0
      %p47 = por %p45, %p46
      %s48 = ssub.s32 %s14, %s21
      %p49 = scmp.eq.s32.totalorder %s48, 0
      %s51 = sadd.s32 %s50, 1
      %s52 = scalar_select %p49, %s50, %s51
      %p55 = pneg %p49
      %p56 = scmp.eq.s32.totalorder %s14, 1
      %p57 = por %p55, %p56
      %p58 = scmp.ne.s32.totalorder %s50, %s53
      %p59 = scmp.eq.s32.totalorder %s14, 0
      %p60 = por %p58, %p59
      %p61 = scmp.ne.s32.totalorder %s50, %s53
      %p62 = scmp.eq.s32.totalorder %s19, 1
      %p63 = por %p61, %p62
      %p64 = scmp.ne.s32.totalorder %s53, %s54
      %p65 = scmp.eq.s32.totalorder %s19, 0
      %p66 = por %p64, %p65
      %p67 = scmp.ne.s32.totalorder %s53, %s54
      %p68 = scmp.eq.s32.totalorder %s20, 1
      %p69 = por %p67, %p68
      %p71 = scmp.ne.s32.totalorder %s54, %s70
      %p72 = scmp.eq.s32.totalorder %s20, 0
      %p73 = por %p71, %p72
      %s74 = ssub.s32 %s14, %s21
      %p75 = scmp.eq.s32.totalorder %s74, 0
      %s77 = sadd.s32 %s76, 1
      %s78 = scalar_select %p75, %s76, %s77
      %p81 = pneg %p75
      %p82 = scmp.eq.s32.totalorder %s14, 1
      %p83 = por %p81, %p82
      %p84 = scmp.ne.s32.totalorder %s76, %s79
      %p85 = scmp.eq.s32.totalorder %s14, 0
      %p86 = por %p84, %p85
      %p87 = scmp.ne.s32.totalorder %s76, %s79
      %p88 = scmp.eq.s32.totalorder %s19, 1
      %p89 = por %p87, %p88
      %p90 = scmp.ne.s32.totalorder %s79, %s80
      %p91 = scmp.eq.s32.totalorder %s19, 0
      %p92 = por %p90, %p91
      %p93 = scmp.ne.s32.totalorder %s79, %s80
      %p94 = scmp.eq.s32.totalorder %s20, 1
      %p95 = por %p93, %p94
      %p97 = scmp.ne.s32.totalorder %s80, %s96
      %p98 = scmp.eq.s32.totalorder %s20, 0
      %p99 = por %p97, %p98
      %s101 = sadd.s32 %s100, 1
      %p104 = scmp.eq.s32.totalorder %s14, 1
      %p105 = scmp.ne.s32.totalorder %s100, %s102
      %p106 = scmp.eq.s32.totalorder %s14, 0
      %p107 = por %p105, %p106
      %p108 = scmp.ne.s32.totalorder %s100, %s102
      %p109 = scmp.eq.s32.totalorder %s19, 1
      %p110 = por %p108, %p109
      %p111 = scmp.ne.s32.totalorder %s102, %s103
      %p112 = scmp.eq.s32.totalorder %s19, 0
      %p113 = por %p111, %p112
      %p114 = scmp.ne.s32.totalorder %s102, %s103
      %p115 = scmp.eq.s32.totalorder %s20, 1
      %p116 = por %p114, %p115
      %p118 = scmp.ne.s32.totalorder %s103, %s117
      %p119 = scmp.eq.s32.totalorder %s20, 0
      %p120 = por %p118, %p119
      %s122 = sadd.s32 %s121, 1
      %p125 = scmp.eq.s32.totalorder %s14, 1
      %p126 = scmp.ne.s32.totalorder %s121, %s123
      %p127 = scmp.eq.s32.totalorder %s14, 0
      %p128 = por %p126, %p127
      %p129 = scmp.ne.s32.totalorder %s121, %s123
      %p130 = scmp.eq.s32.totalorder %s19, 1
      %p131 = por %p129, %p130
      %p132 = scmp.ne.s32.totalorder %s123, %s124
      %p133 = scmp.eq.s32.totalorder %s19, 0
      %p134 = por %p132, %p133
      %p135 = scmp.ne.s32.totalorder %s123, %s124
      %p136 = scmp.eq.s32.totalorder %s20, 1
      %p137 = por %p135, %p136
      %p139 = scmp.ne.s32.totalorder %s124, %s138
      %p140 = scmp.eq.s32.totalorder %s20, 0
      %p141 = por %p139, %p140
      %s142 = ssub.s32 %s14, %s21
      %p143 = scmp.eq.s32.totalorder %s142, 0
      %s145 = sadd.s32 %s144, 1
      %s146 = scalar_select %p143, %s144, %s145
      %p149 = pneg %p143
      %p150 = scmp.eq.s32.totalorder %s14, 1
      %p151 = por %p149, %p150
      %p152 = scmp.ne.s32.totalorder %s144, %s147
      %p153 = scmp.eq.s32.totalorder %s14, 0
      %p154 = por %p152, %p153
      %p155 = scmp.ne.s32.totalorder %s144, %s147
      %p156 = scmp.eq.s32.totalorder %s19, 1
      %p157 = por %p155, %p156
      %p158 = scmp.ne.s32.totalorder %s147, %s148
      %p159 = scmp.eq.s32.totalorder %s19, 0
      %p160 = por %p158, %p159
      %p161 = scmp.ne.s32.totalorder %s147, %s148
      %p162 = scmp.eq.s32.totalorder %s20, 1
      %p163 = por %p161, %p162
      %p165 = scmp.ne.s32.totalorder %s148, %s164
      %p166 = scmp.eq.s32.totalorder %s20, 0
      %p167 = por %p165, %p166
      %p168 = scmp.le.s32.totalorder 1, %s14
      %p169 = scmp.lt.s32.totalorder %s14, 3
      %p170 = pnand %p168, %p169
      %p171 = pneg %p170
      // Predicated region
      $region9: #{tpu_custom_call.1} parent=5 // pred_check
        _
      $region10: #{tpu_custom_call.1} parent=5 // pred_check_branch
        %173 = sbr.rel (%p170) target = $region12
      $region11: #{tpu_custom_call.1} parent=5 // pred_region
        %s174 = ssub.s32 %s14, 1
        // Predicated region
        $region13: #{tpu_custom_call.1} parent=11 // pred_check
          %p175 = pneg %p113
        $region14: #{tpu_custom_call.1} parent=11 // pred_check_branch
          %177 = sbr.rel (%p175) target = $region16
        $region15: #{tpu_custom_call.1} parent=11 // pred_region
          _
        $region16: #{tpu_custom_call.1} parent=11 // pred_fallthru
          _
        // Predicated region
        $region17: #{tpu_custom_call.1} parent=11 // pred_check
          %p178 = pneg %p134
        $region18: #{tpu_custom_call.1} parent=11 // pred_check_branch
          %180 = sbr.rel (%p178) target = $region20
        $region19: #{tpu_custom_call.1} parent=11 // pred_region
          _
        $region20: #{tpu_custom_call.1} parent=11 // pred_fallthru
          _
      $region12: #{tpu_custom_call.1} parent=5 // pred_fallthru
        _
      %p181 = scmp.lt.s32.totalorder %s14, 2
      // Predicated region
      $region21: #{tpu_custom_call.1} parent=5 // pred_check
        %p182 = pneg %p181
      $region22: #{tpu_custom_call.1} parent=5 // pred_check_branch
        %184 = sbr.rel (%p182) target = $region24
      $region23: #{tpu_custom_call.1} parent=5 // pred_region
        // Predicated region
        $region25: #{tpu_custom_call.1} parent=23 // pred_check
          %p185 = pneg %p34
        $region26: #{tpu_custom_call.1} parent=23 // pred_check_branch
          %187 = sbr.rel (%p185) target = $region28
        $region27: #{tpu_custom_call.1} parent=23 // pred_region
          %p188 = scmp.lt.s32.totalorder %s14, 1
          %s189 = scalar_select %p188, %s14, 1
          %s190 = smul.addr %s189, 5
          %s191 = smul.addr %s190, 4
          %s192 = scalar_lea.vmem %s0, %s191
        $region28: #{tpu_custom_call.1} parent=23 // pred_fallthru
          _
        // Predicated region
        $region29: #{tpu_custom_call.1} parent=23 // pred_check
          %p193 = pneg %p60
        $region30: #{tpu_custom_call.1} parent=23 // pred_check_branch
          %195 = sbr.rel (%p193) target = $region32
        $region31: #{tpu_custom_call.1} parent=23 // pred_region
          %p196 = scmp.lt.s32.totalorder %s14, 1
          %s197 = scalar_select %p196, %s14, 1
          %s198 = smul.addr %s197, 5
          %s199 = smul.addr %s198, 4
          %s200 = scalar_lea.vmem %s1, %s199
        $region32: #{tpu_custom_call.1} parent=23 // pred_fallthru
          _
        // Predicated region
        $region33: #{tpu_custom_call.1} parent=23 // pred_check
          %p201 = pneg %p86
        $region34: #{tpu_custom_call.1} parent=23 // pred_check_branch
          %203 = sbr.rel (%p201) target = $region36
        $region35: #{tpu_custom_call.1} parent=23 // pred_region
          %p204 = scmp.lt.s32.totalorder %s14, 1
          %s205 = scalar_select %p204, %s14, 1
          %s206 = smul.addr %s205, 5
          %s207 = smul.addr %s206, 4
          %s208 = scalar_lea.vmem %s2, %s207
        $region36: #{tpu_custom_call.1} parent=23 // pred_fallthru
          _
      $region24: #{tpu_custom_call.1} parent=5 // pred_fallthru
        _
      %p209 = scmp.le.s32.totalorder 1, %s14
      %p210 = scmp.lt.s32.totalorder %s14, 3
      %p211 = pnand %p209, %p210
      %p212 = pneg %p211
      // Predicated region
      $region37: #{tpu_custom_call.1} parent=5 // pred_check
        _
      $region38: #{tpu_custom_call.1} parent=5 // pred_check_branch
        %214 = sbr.rel (%p211) target = $region40
      $region39: #{tpu_custom_call.1} parent=5 // pred_region
        %s215 = ssub.s32 %s14, 1
        %p216 = scmp.lt.s32.totalorder %s19, 1
        %s217 = scalar_select %p216, %s19, 1
        %s218 = smul.addr %s217, 5
        %s219 = smul.addr %s218, 4
        %s220 = scalar_lea.vmem %s0, %s219
        %p221 = pneg %p40
        %p222 = pneg %p37
        %p223 = scmp.lt.s32.totalorder %s19, 1
        %s224 = scalar_select %p223, %s19, 1
        %s225 = smul.addr %s224, 5
        %s226 = smul.addr %s225, 4
        %s227 = scalar_lea.vmem %s1, %s226
        %p228 = pneg %p66
        %p229 = pneg %p63
        %p230 = scmp.lt.s32.totalorder %s19, 1
        %s231 = scalar_select %p230, %s19, 1
        %s232 = smul.addr %s231, 5
        %s233 = smul.addr %s232, 4
        %s234 = scalar_lea.vmem %s2, %s233
        %p235 = pneg %p92
        %p236 = pneg %p89
        %p237 = pneg %p113
        %p238 = pneg %p110
        %p239 = pneg %p134
        %p240 = pneg %p131
        %p241 = pneg %p160
        %p242 = pneg %p157
        %s243 = sand.u32 %s147, 1
        %s244 = scalar_lea.sflag [#allocation3], %s243
        %s245 = sand.u32 %s147, 1
        %s246 = smul.addr %s245, 8
        %s247 = scalar_lea.vmem [#allocation2], %s246
        %p248 = scmp.lt.s32.totalorder %s19, 1
        %s249 = scalar_select %p248, %s19, 1
        %s250 = smul.addr %s249, 5
        %s251 = smul.addr %s250, 4
        %s252 = scalar_lea.vmem %s0, %s251
        %p253 = scmp.lt.s32.totalorder %s19, 1
        %s254 = scalar_select %p253, %s19, 1
        %s255 = smul.addr %s254, 5
        %s256 = smul.addr %s255, 4
        %s257 = scalar_lea.vmem %s1, %s256
        %p258 = scmp.lt.s32.totalorder %s19, 1
        %s259 = scalar_select %p258, %s19, 1
        %s260 = smul.addr %s259, 5
        %s261 = smul.addr %s260, 4
        %s262 = scalar_lea.vmem %s2, %s261
        %v264 = vld [vmem:[%s252] sm:$0xff]
        %v265 = vld [vmem:[%s252 + $0x8] sm:$0xff]
        %v266 = vld [vmem:[%s252 + $0x10] sm:$0xf]
        %v267 = vld [vmem:[%s257] sm:$0xff]
        %v268 = vld [vmem:[%s257 + $0x8] sm:$0xff]
        %v269 = vld [vmem:[%s257 + $0x10] sm:$0xf]
        %v270 = vadd.bf16 %v264, %v267
        %v271 = vadd.bf16 %v265, %v268
        %v272 = vadd.bf16 %v266, %v269
        %v273 = vld [vmem:[%s262] sm:$0xff]
        %v274 = vld [vmem:[%s262 + $0x8] sm:$0xff]
        %v275 = vld [vmem:[%s262 + $0x10] sm:$0xf]
        %v276 = vadd.bf16 %v270, %v273
        %v277 = vadd.bf16 %v271, %v274
        %v278 = vadd.bf16 %v272, %v275
        %v279 = vld [vmem:[%s3] sm:$0xf]
        %v280 = vld [vmem:[%s3 + $0x4] sm:$0xf]
        %v281 = vld [vmem:[%s3 + $0x8] sm:$0xf]
        %v282 = vld [vmem:[%s3 + $0xc] sm:$0xf]
        %v283 = vld [vmem:[%s3 + $0x10] sm:$0xf]
        %v284 = vld [vmem:[%s3 + $0x14] sm:$0xf]
        %v285 = vld [vmem:[%s3 + $0x18] sm:$0xf]
        %v286 = vld [vmem:[%s3 + $0x1c] sm:$0xf]
        %v287 = vld [vmem:[%s3 + $0x20] sm:$0xf]
        %v288 = vld [vmem:[%s3 + $0x24] sm:$0xf]
        %v289 = vld [vmem:[%s3 + $0x28] sm:$0xf]
        %v290 = vld [vmem:[%s3 + $0x2c] sm:$0xf]
        %v291 = vld [vmem:[%s3 + $0x30] sm:$0xf]
        %v292 = vld [vmem:[%s3 + $0x34] sm:$0xf]
        %v293 = vld [vmem:[%s3 + $0x38] sm:$0xf]
        %v294 = vld [vmem:[%s3 + $0x3c] sm:$0xf]
        %v295 = vld [vmem:[%s3 + $0x40] sm:$0xf]
        %v296 = vld [vmem:[%s3 + $0x44] sm:$0xf]
        %v297 = vld [vmem:[%s3 + $0x48] sm:$0xf]
        %v298 = vld [vmem:[%s3 + $0x4c] sm:$0xf]
        %v299 = vld [vmem:[%s3 + $0x50] sm:$0xf]
        %v300 = vld [vmem:[%s3 + $0x54] sm:$0xf]
        %v301 = vld [vmem:[%s3 + $0x58] sm:$0xf]
        %v302 = vld [vmem:[%s3 + $0x5c] sm:$0xf]
        %v303 = vld [vmem:[%s3 + $0x60] sm:$0xf]
        %v304 = vld [vmem:[%s3 + $0x64] sm:$0xf]
        %v305 = vld [vmem:[%s3 + $0x68] sm:$0xf]
        %v306 = vld [vmem:[%s3 + $0x6c] sm:$0xf]
        %v307 = vld [vmem:[%s3 + $0x70] sm:$0xf]
        %v308 = vld [vmem:[%s3 + $0x74] sm:$0xf]
        %v309 = vld [vmem:[%s3 + $0x78] sm:$0xf]
        %v310 = vld [vmem:[%s3 + $0x7c] sm:$0xf]
        %v311 = vld [vmem:[%s3 + $0x80] sm:$0xf]
        %v312 = vld [vmem:[%s3 + $0x84] sm:$0xf]
        %v313 = vld [vmem:[%s3 + $0x88] sm:$0xf]
        %v314 = vld [vmem:[%s3 + $0x8c] sm:$0xf]
        %v315 = vld [vmem:[%s3 + $0x90] sm:$0xf]
        %v316 = vld [vmem:[%s3 + $0x94] sm:$0xf]
        %v317 = vld [vmem:[%s3 + $0x98] sm:$0xf]
        %v318 = vld [vmem:[%s3 + $0x9c] sm:$0xf]
        %v319 = vld [vmem:[%s3 + $0xa0] sm:$0xf]
        %v320 = vld [vmem:[%s3 + $0xa4] sm:$0xf]
        %v321 = vld [vmem:[%s3 + $0xa8] sm:$0xf]
        %v322 = vld [vmem:[%s3 + $0xac] sm:$0xf]
        %v323 = vld [vmem:[%s3 + $0xb0] sm:$0xf]
        %v324 = vld [vmem:[%s3 + $0xb4] sm:$0xf]
        %v325 = vld [vmem:[%s3 + $0xb8] sm:$0xf]
        %v326 = vld [vmem:[%s3 + $0xbc] sm:$0xf]
        %v327 = vld [vmem:[%s3 + $0xc0] sm:$0xf]
        %v328 = vld [vmem:[%s3 + $0xc4] sm:$0xf]
        %v329 = vld [vmem:[%s3 + $0xc8] sm:$0xf]
        %v330 = vld [vmem:[%s3 + $0xcc] sm:$0xf]
        %v331 = vld [vmem:[%s3 + $0xd0] sm:$0xf]
        %v332 = vld [vmem:[%s3 + $0xd4] sm:$0xf]
        %v333 = vld [vmem:[%s3 + $0xd8] sm:$0xf]
        %v334 = vld [vmem:[%s3 + $0xdc] sm:$0xf]
        %v335 = vld [vmem:[%s3 + $0xe0] sm:$0xf]
        %v336 = vld [vmem:[%s3 + $0xe4] sm:$0xf]
        %v337 = vld [vmem:[%s3 + $0xe8] sm:$0xf]
        %v338 = vld [vmem:[%s3 + $0xec] sm:$0xf]
        %v339 = vld [vmem:[%s3 + $0xf0] sm:$0xf]
        %v340 = vld [vmem:[%s3 + $0xf4] sm:$0xf]
        %v341 = vld [vmem:[%s3 + $0xf8] sm:$0xf]
        %v342 = vld [vmem:[%s3 + $0xfc] sm:$0xf]
        %v343 = vld [vmem:[%s3 + $0x100] sm:$0xf]
        %v344 = vld [vmem:[%s3 + $0x104] sm:$0xf]
        %v345 = vld [vmem:[%s3 + $0x108] sm:$0xf]
        %v346 = vld [vmem:[%s3 + $0x10c] sm:$0xf]
        %v347 = vld [vmem:[%s3 + $0x110] sm:$0xf]
        %v348 = vld [vmem:[%s3 + $0x114] sm:$0xf]
        %v349 = vld [vmem:[%s3 + $0x118] sm:$0xf]
        %v350 = vld [vmem:[%s3 + $0x11c] sm:$0xf]
        %v351 = vld [vmem:[%s4] sm:$0x1]
        %v353 = vlaneseq
        %v354 = vshrl.u32 %v353, 7
        %v355 = vsub.s32 0, %v354
        %v356 = vrot.slane %v351, %v355
        %v361 = vunpack.c.l.b16 %v276
        %v362 = vunpack.c.h.b16 %v276
        %v363 = vunpack.c.l.b16 %v277
        %v364 = vunpack.c.h.b16 %v277
        %v365 = vunpack.c.l.b16 %v278
        %v366 = vpack.c.b16 %v361, %v361
        %v367 = vpack.c.b16 %v362, %v362
        %v368 = vpack.c.b16 %v363, %v363
        %v369 = vpack.c.b16 %v364, %v364
        %v370 = vpack.c.b16 %v365, %v365
        %v447 = vunpack.c.l.b16 %v279
        %v448 = vunpack.c.l.b16 %v280
        %v449 = vunpack.c.l.b16 %v281
        %v450 = vunpack.c.l.b16 %v282
        %v451 = vunpack.c.l.b16 %v283
        %v452 = vunpack.c.l.b16 %v284
        %v453 = vunpack.c.l.b16 %v285
        %v454 = vunpack.c.l.b16 %v286
        %v455 = vunpack.c.l.b16 %v287
        %v456 = vunpack.c.l.b16 %v288
        %v457 = vunpack.c.l.b16 %v289
        %v458 = vunpack.c.l.b16 %v290
        %v459 = vunpack.c.l.b16 %v291
        %v460 = vunpack.c.l.b16 %v292
        %v461 = vunpack.c.l.b16 %v293
        %v462 = vunpack.c.l.b16 %v294
        %v463 = vunpack.c.l.b16 %v295
        %v464 = vunpack.c.l.b16 %v296
        %v465 = vunpack.c.l.b16 %v297
        %v466 = vunpack.c.l.b16 %v298
        %v467 = vunpack.c.l.b16 %v299
        %v468 = vunpack.c.l.b16 %v300
        %v469 = vunpack.c.l.b16 %v301
        %v470 = vunpack.c.l.b16 %v302
        %v471 = vunpack.c.l.b16 %v303
        %v472 = vunpack.c.l.b16 %v304
        %v473 = vunpack.c.l.b16 %v305
        %v474 = vunpack.c.l.b16 %v306
        %v475 = vunpack.c.l.b16 %v307
        %v476 = vunpack.c.l.b16 %v308
        %v477 = vunpack.c.l.b16 %v309
        %v478 = vunpack.c.l.b16 %v310
        %v479 = vunpack.c.l.b16 %v311
        %v480 = vunpack.c.l.b16 %v312
        %v481 = vunpack.c.l.b16 %v313
        %v482 = vunpack.c.l.b16 %v314
        %v483 = vunpack.c.l.b16 %v315
        %v484 = vunpack.c.l.b16 %v316
        %v485 = vunpack.c.l.b16 %v317
        %v486 = vunpack.c.l.b16 %v318
        %v487 = vunpack.c.l.b16 %v319
        %v488 = vunpack.c.l.b16 %v320
        %v489 = vunpack.c.l.b16 %v321
        %v490 = vunpack.c.l.b16 %v322
        %v491 = vunpack.c.l.b16 %v323
        %v492 = vunpack.c.l.b16 %v324
        %v493 = vunpack.c.l.b16 %v325
        %v494 = vunpack.c.l.b16 %v326
        %v495 = vunpack.c.l.b16 %v327
        %v496 = vunpack.c.l.b16 %v328
        %v497 = vunpack.c.l.b16 %v329
        %v498 = vunpack.c.l.b16 %v330
        %v499 = vunpack.c.l.b16 %v331
        %v500 = vunpack.c.l.b16 %v332
        %v501 = vunpack.c.l.b16 %v333
        %v502 = vunpack.c.l.b16 %v334
        %v503 = vunpack.c.l.b16 %v335
        %v504 = vunpack.c.l.b16 %v336
        %v505 = vunpack.c.l.b16 %v337
        %v506 = vunpack.c.l.b16 %v338
        %v507 = vunpack.c.l.b16 %v339
        %v508 = vunpack.c.l.b16 %v340
        %v509 = vunpack.c.l.b16 %v341
        %v510 = vunpack.c.l.b16 %v342
        %v511 = vunpack.c.l.b16 %v343
        %v512 = vunpack.c.l.b16 %v344
        %v513 = vunpack.c.l.b16 %v345
        %v514 = vunpack.c.l.b16 %v346
        %v515 = vunpack.c.l.b16 %v347
        %v516 = vunpack.c.l.b16 %v348
        %v517 = vunpack.c.l.b16 %v349
        %v518 = vunpack.c.l.b16 %v350
        %v519 = vpack.c.b16 %v448, %v447
        %v520 = vpack.c.b16 %v450, %v449
        %v521 = vpack.c.b16 %v452, %v451
        %v522 = vpack.c.b16 %v454, %v453
        %v523 = vpack.c.b16 %v456, %v455
        %v524 = vpack.c.b16 %v458, %v457
        %v525 = vpack.c.b16 %v460, %v459
        %v526 = vpack.c.b16 %v462, %v461
        %v527 = vpack.c.b16 %v464, %v463
        %v528 = vpack.c.b16 %v466, %v465
        %v529 = vpack.c.b16 %v468, %v467
        %v530 = vpack.c.b16 %v470, %v469
        %v531 = vpack.c.b16 %v472, %v471
        %v532 = vpack.c.b16 %v474, %v473
        %v533 = vpack.c.b16 %v476, %v475
        %v534 = vpack.c.b16 %v478, %v477
        %v535 = vpack.c.b16 %v480, %v479
        %v536 = vpack.c.b16 %v482, %v481
        %v537 = vpack.c.b16 %v484, %v483
        %v538 = vpack.c.b16 %v486, %v485
        %v539 = vpack.c.b16 %v488, %v487
        %v540 = vpack.c.b16 %v490, %v489
        %v541 = vpack.c.b16 %v492, %v491
        %v542 = vpack.c.b16 %v494, %v493
        %v543 = vpack.c.b16 %v496, %v495
        %v544 = vpack.c.b16 %v498, %v497
        %v545 = vpack.c.b16 %v500, %v499
        %v546 = vpack.c.b16 %v502, %v501
        %v547 = vpack.c.b16 %v504, %v503
        %v548 = vpack.c.b16 %v506, %v505
        %v549 = vpack.c.b16 %v508, %v507
        %v550 = vpack.c.b16 %v510, %v509
        %v551 = vpack.c.b16 %v512, %v511
        %v552 = vpack.c.b16 %v514, %v513
        %v553 = vpack.c.b16 %v516, %v515
        %v554 = vpack.c.b16 %v518, %v517
        %vm591 = vcmask 523264
        %v593 = vsel %vm591, %v370, 0
        %595 = vmatprep.subr.bf16.mxu0 0
        %596 = vmatpush1.bf16.msra.mxu0 %v519
        %597 = vmatprep.subr.bf16.mxu0 0
        %598 = vmatpush1.bf16.msra.mxu0 %v520
        %599 = vmatprep.subr.bf16.mxu0 0
        %600 = vmatpush1.bf16.msra.mxu0 %v521
        %601 = vmatprep.subr.bf16.mxu0 0
        %602 = vmatpush1.bf16.msra.mxu0 %v522
        %603 = vmatprep.subr.bf16.mxu0 0
        %604 = vmatpush1.bf16.msra.mxu0 %v523
        %605 = vmatprep.subr.bf16.mxu0 0
        %606 = vmatpush1.bf16.msra.mxu0 %v524
        %607 = vmatprep.subr.bf16.mxu0 0
        %608 = vmatpush1.bf16.msra.mxu0 %v525
        %609 = vmatprep.subr.bf16.mxu0 0
        %610 = vmatpush1.bf16.msra.mxu0 %v526
        %611 = vmatprep.subr.bf16.mxu0 0
        %612 = vmatpush1.bf16.msra.mxu0 %v527
        %613 = vmatprep.subr.bf16.mxu0 0
        %614 = vmatpush1.bf16.msra.mxu0 %v528
        %615 = vmatprep.subr.bf16.mxu0 0
        %616 = vmatpush1.bf16.msra.mxu0 %v529
        %617 = vmatprep.subr.bf16.mxu0 0
        %618 = vmatpush1.bf16.msra.mxu0 %v530
        %619 = vmatprep.subr.bf16.mxu0 0
        %620 = vmatpush1.bf16.msra.mxu0 %v531
        %621 = vmatprep.subr.bf16.mxu0 0
        %622 = vmatpush1.bf16.msra.mxu0 %v532
        %623 = vmatprep.subr.bf16.mxu0 0
        %624 = vmatpush1.bf16.msra.mxu0 %v533
        %625 = vmatprep.subr.bf16.mxu0 0
        %626 = vmatpush1.bf16.msra.mxu0 %v534
        %627 = vmatprep.mubr.bf16.mxu0 %v367
        %628 = vmatmul.mubr.bf16.gmra.mrb[0].mxu0 %v366
        %v629 = vpop.f32.mrb[0].mxu0
        %v630 = vadd.f32 %v356, %v629
        %v631 = vpop.f32.mrb[0].mxu0
        %v632 = vpop.f32.mrb[0].mxu0
        %v633 = vpop.f32.mrb[0].mxu0
        %634 = vdwg.mxu0
        %635 = vmatprep.subr.bf16.mxu0 0
        %636 = vmatpush1.bf16.msra.mxu0 %v535
        %637 = vmatprep.subr.bf16.mxu0 0
        %638 = vmatpush1.bf16.msra.mxu0 %v536
        %639 = vmatprep.subr.bf16.mxu0 0
        %640 = vmatpush1.bf16.msra.mxu0 %v537
        %641 = vmatprep.subr.bf16.mxu0 0
        %642 = vmatpush1.bf16.msra.mxu0 %v538
        %643 = vmatprep.subr.bf16.mxu0 0
        %644 = vmatpush1.bf16.msra.mxu0 %v539
        %645 = vmatprep.subr.bf16.mxu0 0
        %646 = vmatpush1.bf16.msra.mxu0 %v540
        %647 = vmatprep.subr.bf16.mxu0 0
        %648 = vmatpush1.bf16.msra.mxu0 %v541
        %649 = vmatprep.subr.bf16.mxu0 0
        %650 = vmatpush1.bf16.msra.mxu0 %v542
        %651 = vmatprep.subr.bf16.mxu0 0
        %652 = vmatpush1.bf16.msra.mxu0 %v543
        %653 = vmatprep.subr.bf16.mxu0 0
        %654 = vmatpush1.bf16.msra.mxu0 %v544
        %655 = vmatprep.subr.bf16.mxu0 0
        %656 = vmatpush1.bf16.msra.mxu0 %v545
        %657 = vmatprep.subr.bf16.mxu0 0
        %658 = vmatpush1.bf16.msra.mxu0 %v546
        %659 = vmatprep.subr.bf16.mxu0 0
        %660 = vmatpush1.bf16.msra.mxu0 %v547
        %661 = vmatprep.subr.bf16.mxu0 0
        %662 = vmatpush1.bf16.msra.mxu0 %v548
        %663 = vmatprep.subr.bf16.mxu0 0
        %664 = vmatpush1.bf16.msra.mxu0 %v549
        %665 = vmatprep.subr.bf16.mxu0 0
        %666 = vmatpush1.bf16.msra.mxu0 %v550
        %667 = vmatprep.mubr.bf16.mxu0 %v369
        %668 = vmatmul.mubr.bf16.gmra.mrb[0].mxu0 %v368
        %v669 = vpop.f32.mrb[0].mxu0
        %v670 = vadd.f32 %v630, %v669
        %v671 = vpop.f32.mrb[0].mxu0
        %v672 = vpop.f32.mrb[0].mxu0
        %v673 = vpop.f32.mrb[0].mxu0
        %674 = vdwg.mxu0
        %675 = vmatprep.subr.bf16.mxu0 0
        %676 = vmatpush1.bf16.msra.mxu0 %v551
        %677 = vmatprep.subr.bf16.mxu0 0
        %678 = vmatpush1.bf16.msra.mxu0 %v552
        %679 = vmatprep.subr.bf16.mxu0 0
        %680 = vmatpush1.bf16.msra.mxu0 %v553
        %681 = vmatprep.subr.bf16.mxu0 0
        %682 = vmatpush1.bf16.msra.mxu0 %v554
        %683 = vmatprep.subr.bf16.mxu0 0
        %684 = vmatpush1.bf16.msra.mxu0 0
        %685 = vmatprep.subr.bf16.mxu0 0
        %686 = vmatpush1.bf16.msra.mxu0 0
        %687 = vmatprep.subr.bf16.mxu0 0
        %688 = vmatpush1.bf16.msra.mxu0 0
        %689 = vmatprep.subr.bf16.mxu0 0
        %690 = vmatpush1.bf16.msra.mxu0 0
        %691 = vmatprep.subr.bf16.mxu0 0
        %692 = vmatpush1.bf16.msra.mxu0 0
        %693 = vmatprep.subr.bf16.mxu0 0
        %694 = vmatpush1.bf16.msra.mxu0 0
        %695 = vmatprep.subr.bf16.mxu0 0
        %696 = vmatpush1.bf16.msra.mxu0 0
        %697 = vmatprep.subr.bf16.mxu0 0
        %698 = vmatpush1.bf16.msra.mxu0 0
        %699 = vmatprep.subr.bf16.mxu0 0
        %700 = vmatpush1.bf16.msra.mxu0 0
        %701 = vmatprep.subr.bf16.mxu0 0
        %702 = vmatpush1.bf16.msra.mxu0 0
        %703 = vmatprep.subr.bf16.mxu0 0
        %704 = vmatpush1.bf16.msra.mxu0 0
        %705 = vmatprep.subr.bf16.mxu0 0
        %706 = vmatpush1.bf16.msra.mxu0 0
        %707 = vmatprep.mubr.bf16.mxu0 0
        %708 = vmatmul.mubr.bf16.gmra.mrb[0].mxu0 %v593
        %v709 = vpop.f32.mrb[0].mxu0
        %v710 = vadd.f32 %v670, %v709
        %v711 = vpop.f32.mrb[0].mxu0
        %v712 = vpop.f32.mrb[0].mxu0
        %v713 = vpop.f32.mrb[0].mxu0
        %714 = vdwg.mxu0
        %vm715 = vcmask 211968
        %716 = vst.msk [vmem:[%s247] sm:$0xff] %vm715, %v710
        %s717 = sand.u32 %s147, 1
        %s718 = scalar_lea.sflag [#allocation3], %s717
        %s719 = sand.u32 %s147, 1
        %s720 = smul.addr %s719, 8
        %s721 = scalar_lea.vmem [#allocation2], %s720
        // Predicated region
        $region41: #{tpu_custom_call.1} parent=39 // pred_check
          %p722 = pneg %p157
        $region42: #{tpu_custom_call.1} parent=39 // pred_check_branch
          %724 = sbr.rel (%p722) target = $region44
        $region43: #{tpu_custom_call.1} parent=39 // pred_region
          %s726 = ssub.s32 128, 128
          %727 = vsyncadd %s718, %s726
          %s728 = smul.addr %s19, 128
          %s729 = scalar_lea.hbm %s5, %s728
          %s731 = sshll.u32 %s721, 4
          %s732 = int_to_ptr.vmem [resolvable:$true] %s731
          %734 = dma.vmem_to_hbm [thread:$0]  %s732, 128, %s729, %s718
        $region44: #{tpu_custom_call.1} parent=39 // pred_fallthru
          _
      $region40: #{tpu_custom_call.1} parent=5 // pred_fallthru
        _
      %p735 = scmp.le.s32.totalorder 2, %s14
      // Predicated region
      $region45: #{tpu_custom_call.1} parent=5 // pred_check
        %p736 = pneg %p735
      $region46: #{tpu_custom_call.1} parent=5 // pred_check_branch
        %738 = sbr.rel (%p736) target = $region48
      $region47: #{tpu_custom_call.1} parent=5 // pred_region
        %s739 = ssub.s32 %s14, 2
        // Predicated region
        $region49: #{tpu_custom_call.1} parent=47 // pred_check
          %p740 = pneg %p163
        $region50: #{tpu_custom_call.1} parent=47 // pred_check_branch
          %742 = sbr.rel (%p740) target = $region52
        $region51: #{tpu_custom_call.1} parent=47 // pred_region
          %s743 = sand.u32 %s148, 1
          %s744 = scalar_lea.sflag [#allocation3], %s743
          %s745 = sand.u32 %s148, 1
          %s746 = smul.addr %s745, 8
          %s747 = scalar_lea.vmem [#allocation2], %s746
          %748 = dma.done %s744, 128
        $region52: #{tpu_custom_call.1} parent=47 // pred_fallthru
          _
      $region48: #{tpu_custom_call.1} parent=5 // pred_fallthru
        _
    $region6: #{tpu_custom_call.1} parent=1 // loop_footer
      %s18 = sadd.s32 1, %s14
    $region7: #{tpu_custom_call.1} parent=1 // loop_footer_branch
      %13 = sbr.rel target = $region3
    $region8: #{tpu_custom_call.1} parent=1 // loop_exit
      _
    %749 = vsyncpa [#allocation3], 1
    %s750 = scalar_lea.sflag [#allocation3], 1
    %751 = vsyncpa %s750, 1

</llo_original>
